<compile_context>
chip_gen: v7x
topology: tpu7x:2x2x1
jax: 0.10.0
libtpu: 0.0.40
codegen_flags: <defaults>
</compile_context>

<pallas_src>
import jax
import jax.numpy as jnp
from jax.experimental import pallas as pl
from jax.experimental.pallas import tpu as pltpu

_POS_ALPHA = 0.0005
_BCE_EPS = 1e-7


# ----------------------------------------------------------------------------
# Fused Pallas kernel: one bf16 Gram of [mask; pred; nll; ones] per grid step
# ----------------------------------------------------------------------------
def _fused_kernel(m_ref, p_ref, g_ref, x_ref):
    """One grid step: (C, TL) slabs of mask/pred -> g_ref += x·xᵀ (MXU)."""
    C = m_ref.shape[0]

    @pl.when(pl.program_id(2) == 0)
    def _init():
        g_ref[...] = jnp.zeros_like(g_ref)
        # Two identical all-ones rows so the store is packed-word aligned in
        # bf16; x_ref persists across the L-reduction steps of this (s, b).
        x_ref[pl.ds(3 * C, 2), :] = jnp.ones((2, x_ref.shape[1]), jnp.bfloat16)

    m = m_ref[...]                                  # (C, TL) float32
    p = p_ref[...]

    # BCE negative log-likelihood (binary mask => ONE log per element, f32 on
    # the EUP).  Class weights and the global mean are applied outside.
    pos = m > 0.5
    q = jnp.maximum(jnp.where(pos, p, 1.0 - p), _BCE_EPS)
    nll = -jnp.log(q)

    # Assemble the stacked bf16 operand at word-aligned sublane offsets
    # (rows: [0:C]=m, [C:2C]=p, [2C:3C]=nll, [3C:3C+2]=ones).
    x_ref[pl.ds(0, C), :] = m.astype(jnp.bfloat16)
    x_ref[pl.ds(C, C), :] = p.astype(jnp.bfloat16)
    x_ref[pl.ds(2 * C, C), :] = nll.astype(jnp.bfloat16)

    xv = x_ref[...]
    g_ref[...] += jax.lax.dot_general(
        xv, xv, (((1,), (1,)), ((), ())),
        preferred_element_type=jnp.float32)


def _lane_tile(l_pad128, C, max_lane_tile):
    """Lane tile (multiple of 128) sized so double-buffered inputs plus
    in-kernel temporaries (~32·C·TL bytes) stay well under every generation's
    scoped-VMEM default (v5e 16 MiB, v6e/v7x 32 MiB)."""
    budget_bytes = 8 << 20
    cap = max(128, (budget_bytes // (32 * C)) // 128 * 128)
    tl = min(max_lane_tile, cap, l_pad128)
    return max(128, (tl // 128) * 128)


def spmi_stats(mask_bchw, pred_bchw, class_weight, *, max_lane_tile=32768):
    """Single fused HBM streaming pass over mask/pred.

    Returns ((mm, mp, pp, sum_m, sum_p), bce) where mm/mp/pp are UNcentered
    Gram blocks (centering applied in _mi_from_stats) and bce is the
    class-weighted binary cross entropy (mean over all real elements).
    """
    B, C, H, W = mask_bchw.shape
    L = H * W
    m = mask_bchw.reshape(B, C, L).astype(jnp.float32)
    p = pred_bchw.reshape(B, C, L).astype(jnp.float32)

    R = 3 * C + 2                                   # [m; p; nll; 1; 1] rows
    L128 = pl.cdiv(L, 128) * 128
    TL = _lane_tile(L128, C, max(128, (max_lane_tile // 128) * 128))
    # v7x has 2 TensorCores that only get work via "parallel" grid axes: when
    # B == 1 split the L reduction into 2 parallel chunks (summed outside).
    S = 2 if (B == 1 and L128 > TL) else 1
    Lp = pl.cdiv(L128, S * TL) * (S * TL)
    if Lp != L:
        # Zero padding contributes exactly 0 to every Gram entry and to the
        # BCE partial sums (padded pred=0 -> nll=-log(1)=0); divisor uses L.
        m = jnp.pad(m, ((0, 0), (0, 0), (0, Lp - L)))
        p = jnp.pad(p, ((0, 0), (0, 0), (0, Lp - L)))
    nL = Lp // (S * TL)

    in_spec = pl.BlockSpec((pl.Squeezed(), C, TL),
                           lambda s, b, l: (b, 0, s * nL + l))
    out_spec = pl.BlockSpec((pl.Squeezed(), pl.Squeezed(), R, R),
                            lambda s, b, l: (s, b, 0, 0))

    cost = pl.CostEstimate(
        flops=int(2 * B * R * R * Lp + 10 * B * C * Lp),
        transcendentals=int(B * C * Lp),
        bytes_accessed=int(2 * B * C * Lp * 4 + S * B * R * R * 4))

    g_parts = pl.pallas_call(
        _fused_kernel,
        grid=(S, B, nL),
        out_shape=jax.ShapeDtypeStruct((S, B, R, R), jnp.float32),
        in_specs=[in_spec, in_spec],
        out_specs=out_spec,
        scratch_shapes=[pltpu.VMEM((R, TL), jnp.bfloat16)],
        compiler_params=pltpu.CompilerParams(
            dimension_semantics=("parallel", "parallel", "arbitrary"),
            vmem_limit_bytes=32 * 1024 * 1024),
        cost_estimate=cost,
    )(m, p)

    g = jnp.sum(g_parts, axis=0)                    # combine parallel L-splits

    mm = g[:, :C, :C]                               # Σ m·mᵀ
    mp = g[:, :C, C:2 * C]                          # Σ m·pᵀ
    pp = g[:, C:2 * C, C:2 * C]                     # Σ p·pᵀ
    sum_m = g[:, :C, 3 * C]                         # (B, C): Σ m
    sum_p = g[:, C:2 * C, 3 * C]                    # (B, C): Σ p
    pos_nll = jnp.diagonal(g[:, 2 * C:3 * C, :C], axis1=1, axis2=2).sum(-1)
    tot_nll = g[:, 2 * C:3 * C, 3 * C].sum(-1)
    neg_nll = tot_nll - pos_nll

    cw = jnp.asarray(class_weight, jnp.float32)
    bce = (cw[1] * jnp.sum(pos_nll) + cw[0] * jnp.sum(neg_nll)) / jnp.float32(B * C * L)
    return (mm, mp, pp, sum_m, sum_p), bce


# ----------------------------------------------------------------------------
# MI glue (tiny CxC linear algebra) — plain JAX, not the hot path
# ----------------------------------------------------------------------------
def _mi_from_stats(mm, mp, pp, sum_m, sum_p, L):
    C = mm.shape[-1]
    inv_l = 1.0 / float(L)
    var_mask = mm - sum_m[:, :, None] * sum_m[:, None, :] * inv_l
    cov = mp - sum_m[:, :, None] * sum_p[:, None, :] * inv_l
    var_pred = pp - sum_p[:, :, None] * sum_p[:, None, :] * inv_l

    eye = jnp.eye(C, dtype=jnp.float32)[None]
    inv_cov_pred = jnp.linalg.inv(var_pred + eye * _POS_ALPHA)
    cond = var_mask - cov @ inv_cov_pred @ jnp.swapaxes(cov, -1, -2)
    cond = 0.5 * (cond + jnp.swapaxes(cond, -1, -2))    # f32 robustness
    chol = jnp.linalg.cholesky(cond)
    diag = jnp.diagonal(chol, axis1=-2, axis2=-1)
    return 2.0 * jnp.sum(jnp.log(diag + 1e-8), axis=-1)   # (B,)


def mi(mask_bchw, pred_bchw, *, max_lane_tile=32768):
    """Port of SPMILoss.mi (f32 instead of torch.cuda.DoubleTensor)."""
    _, _, H, W = mask_bchw.shape
    stats, _ = spmi_stats(mask_bchw, pred_bchw, jnp.ones((2,), jnp.float32),
                          max_lane_tile=max_lane_tile)
    return _mi_from_stats(*stats, L=H * W)


def weight_map_bce(mask_bchw, pred_bchw, w_map, class_weight):
    # TODO(synk): loss.Weight_Map_BCE is not defined in the provided source; this
    # implements a standard class-weighted BCE (binary labels) for w_map=None.
    del w_map
    _, bce = spmi_stats(mask_bchw, pred_bchw, class_weight)
    return bce


# ----------------------------------------------------------------------------
# SPMILoss forward
# ----------------------------------------------------------------------------
class SPMILoss:
    def __init__(self, imageSize, spN=4, spK=4, beta=0.25, lamb=0.5, mag=1,
                 map_method=2, map_weight=1, ffl=False):
        self.N = spN
        self.K = spK
        self.beta = beta
        self.ffl = ffl
        self.lamb = lamb
        self.mag = mag
        self.map_method = map_method
        self.map_weight = map_weight

    def _sp(self, x):
        # TODO(synk): SteerablePyramid is an external module whose definition is
        # not in the provided source; identity bands are used so the MI hot path
        # operates on the raw tensors instead of pyramid sub-bands.
        return [x for _ in range(self.N + 2)]

    def __call__(self, mask, pred, w_map, class_weight, epoch=None):
        _, _, H, W = mask.shape
        if epoch == 0:   # Python-level check, mirrors the reference module
            return weight_map_bce(mask, pred, None, class_weight)

        sp_mask = self._sp(mask)
        sp_pred = self._sp(pred)

        # One fused HBM pass produces BOTH the MI covariance statistics and the
        # weighted-BCE sums (valid because the pyramid stub is identity, so the
        # band tensors equal the raw mask/pred); the N identical bands reuse a
        # single mi() evaluation instead of N redundant streaming passes.
        stats, bce = spmi_stats(sp_mask[1], sp_pred[1], class_weight)
        if not self.ffl:
            mi_band = jnp.mean(_mi_from_stats(*stats, L=H * W))
        else:
            diff = sp_mask[1] - sp_pred[1]
            mi_band = jnp.mean(jnp.log(jnp.linalg.norm(diff, axis=1)))
        mi_output = [mi_band] * self.N   # computed but unused, as in the reference
        del mi_output

        # TODO(synk): SPMap (no-grad w_map branch) is an external undefined module;
        # it is omitted here — like in the reference it does not affect the return.
        loss = bce * self.lamb
        return loss


if __name__ == "__main__":
    key = jax.random.PRNGKey(0)
    k1, k2 = jax.random.split(key)
    B, C, H, W = 2, 4, 16, 16
    mask = (jax.random.uniform(k1, (B, C, H, W)) > 0.5).astype(jnp.float32)
    pred = jax.nn.sigmoid(jax.random.normal(k2, (B, C, H, W), jnp.float32))
    class_weight = jnp.array([1.0, 2.0], jnp.float32)

    spmi = SPMILoss(imageSize=H, spN=4, spK=4, lamb=0.5)
    loss = jax.block_until_ready(spmi(mask, pred, None, class_weight, epoch=1))
    loss0 = jax.block_until_ready(spmi(mask, pred, None, class_weight, epoch=0))
    per_batch_mi = jax.block_until_ready(mi(mask, pred))
    # L-reduction (multi-step accumulation) path.
    per_batch_mi_tiled = jax.block_until_ready(mi(mask, pred, max_lane_tile=128))
    # B == 1 path: L reduction split over the 2-wide "parallel" axis (v7x).
    mi_split = jax.block_until_ready(mi(mask[:1], pred[:1], max_lane_tile=128))
    # Non-128-multiple spatial size: exercises the zero-padding path.
    mask_p = mask[:, :, :10, :10]
    pred_p = pred[:, :, :10, :10]
    mi_pad = jax.block_until_ready(mi(mask_p, pred_p))

    # ---- pure-JAX reference cross-checks -----------------------------------
    def ref_mi_fn(mask4, pred4):
        b, c, h, w = mask4.shape
        mf = mask4.reshape(b, c, h * w)
        pf = pred4.reshape(b, c, h * w)
        mc = mf - mf.mean(axis=2, keepdims=True)
        pc = pf - pf.mean(axis=2, keepdims=True)
        var_m = mc @ jnp.swapaxes(mc, 1, 2)
        var_p = pc @ jnp.swapaxes(pc, 1, 2)
        cov = mc @ jnp.swapaxes(pc, 1, 2)
        eye = jnp.eye(c, dtype=jnp.float32)[None]
        cond = var_m - cov @ jnp.linalg.inv(var_p + eye * _POS_ALPHA) @ jnp.swapaxes(cov, 1, 2)
        chol = jnp.linalg.cholesky(cond)
        return 2.0 * jnp.sum(
            jnp.log(jnp.diagonal(chol, axis1=-2, axis2=-1) + 1e-8), axis=-1)

    ref_mi_val = ref_mi_fn(mask, pred)
    ref_mi_pad = ref_mi_fn(mask_p, pred_p)

    pcl = jnp.clip(pred, _BCE_EPS, 1.0 - _BCE_EPS)
    wts = jnp.where(mask > 0.5, class_weight[1], class_weight[0])
    ref_bce = jnp.mean(wts * -(mask * jnp.log(pcl) + (1.0 - mask) * jnp.log1p(-pcl)))

    assert loss.shape == () and bool(jnp.isfinite(loss))
    assert loss0.shape == () and bool(jnp.isfinite(loss0))
    assert per_batch_mi.shape == (B,)
    assert bool(jnp.all(jnp.isfinite(per_batch_mi)))
    assert bool(jnp.allclose(per_batch_mi, ref_mi_val, rtol=1e-2, atol=1e-2))
    assert bool(jnp.allclose(per_batch_mi, per_batch_mi_tiled, rtol=1e-3, atol=1e-3))
    assert bool(jnp.allclose(mi_split, ref_mi_val[:1], rtol=1e-2, atol=1e-2))
    assert bool(jnp.allclose(mi_pad, ref_mi_pad, rtol=1e-2, atol=1e-2))
    assert bool(jnp.allclose(loss0, ref_bce, rtol=5e-3, atol=1e-5))
    assert bool(jnp.allclose(loss, ref_bce * 0.5, rtol=5e-3, atol=1e-5))
    print("KERNEL_OK")
</pallas_src>

<mosaic_0001>
module attributes {stable_mosaic.version = 11 : i64} {
  func.func @_fused_kernel(%arg0: i32, %arg1: i32, %arg2: i32, %arg3: memref<1x4x256xf32, #tpu.memory_space<vmem>>, %arg4: memref<1x4x256xf32, #tpu.memory_space<vmem>>, %arg5: memref<1x1x14x14xf32, #tpu.memory_space<vmem>>, %arg6: memref<14x256xbf16, #tpu.memory_space<vmem>>) attributes {dimension_semantics = [#tpu.dimension_semantics<parallel>, #tpu.dimension_semantics<parallel>, #tpu.dimension_semantics<arbitrary>], iteration_bounds = array<i64: 1, 2, 1>, scalar_prefetch = 0 : i64, scratch_operands = 1 : i64, tpu.core_type = #tpu.core_type<tc>, window_params = [{transform_indices = @transform_0, window_bounds = array<i64: 1, 4, 256>}, {transform_indices = @transform_1, window_bounds = array<i64: 1, 4, 256>}, {transform_indices = @transform_2, window_bounds = array<i64: 1, 1, 14, 14>}]} {
    %c0_i32 = arith.constant 0 : i32
    %0 = arith.cmpi eq, %arg2, %c0_i32 : i32
    %1 = arith.extui %0 : i1 to i32
    %c0_i32_0 = arith.constant 0 : i32
    %2 = arith.cmpi ne, %1, %c0_i32_0 : i32
    scf.if %2 {
      %cst_24 = arith.constant 0.000000e+00 : f32
      %31 = vector.broadcast %cst_24 : f32 to vector<14x14xf32>
      %c0_25 = arith.constant 0 : index
      %c0_26 = arith.constant 0 : index
      %c0_27 = arith.constant 0 : index
      %c0_28 = arith.constant 0 : index
      %32 = vector.load %arg5[%c0_25, %c0_26, %c0_27, %c0_28] : memref<1x1x14x14xf32, #tpu.memory_space<vmem>>, vector<1x1x14x14xf32>
      %33 = vector.shape_cast %32 : vector<1x1x14x14xf32> to vector<14x14xf32>
      %34 = vector.shape_cast %31 : vector<14x14xf32> to vector<1x1x14x14xf32>
      tpu.vector_store %arg5[%c0_25, %c0_26, %c0_27, %c0_28], %34 {strides = array<i32>} : memref<1x1x14x14xf32, #tpu.memory_space<vmem>>, vector<1x1x14x14xf32>,
      %cst_29 = arith.constant 1.000000e+00 : bf16
      %35 = vector.broadcast %cst_29 : bf16 to vector<2x256xbf16>
      %c12 = arith.constant 12 : index
      %c0_30 = arith.constant 0 : index
      %36 = vector.load %arg6[%c12, %c0_30] : memref<14x256xbf16, #tpu.memory_space<vmem>>, vector<2x256xbf16>
      tpu.vector_store %arg6[%c12, %c0_30], %35 {strides = array<i32>} : memref<14x256xbf16, #tpu.memory_space<vmem>>, vector<2x256xbf16>,
    } else {
    }
    %c0 = arith.constant 0 : index
    %c0_1 = arith.constant 0 : index
    %c0_2 = arith.constant 0 : index
    %3 = vector.load %arg3[%c0, %c0_1, %c0_2] : memref<1x4x256xf32, #tpu.memory_space<vmem>>, vector<1x4x256xf32>
    %4 = vector.shape_cast %3 : vector<1x4x256xf32> to vector<4x256xf32>
    %c0_3 = arith.constant 0 : index
    %c0_4 = arith.constant 0 : index
    %c0_5 = arith.constant 0 : index
    %5 = vector.load %arg4[%c0_3, %c0_4, %c0_5] : memref<1x4x256xf32, #tpu.memory_space<vmem>>, vector<1x4x256xf32>
    %6 = vector.shape_cast %5 : vector<1x4x256xf32> to vector<4x256xf32>
    %cst = arith.constant 5.000000e-01 : f32
    %7 = vector.broadcast %cst : f32 to vector<4x256xf32>
    %8 = arith.cmpf ogt, %4, %7 : vector<4x256xf32>
    %cst_6 = arith.constant 1.000000e+00 : f32
    %9 = vector.broadcast %cst_6 : f32 to vector<4x256xf32>
    %10 = arith.subf %9, %6 : vector<4x256xf32>
    %11 = arith.select %8, %6, %10 : vector<4x256xi1>, vector<4x256xf32>
    %cst_7 = arith.constant 1.000000e-07 : f32
    %12 = vector.broadcast %cst_7 : f32 to vector<4x256xf32>
    %13 = arith.maximumf %11, %12 : vector<4x256xf32>
    %14 = math.log %13 : vector<4x256xf32>
    %cst_8 = arith.constant 0.000000e+00 : f32
    %15 = vector.broadcast %cst_8 : f32 to vector<4x256xf32>
    %16 = arith.subf %15, %14 : vector<4x256xf32>
    %17 = arith.truncf %4 : vector<4x256xf32> to vector<4x256xbf16>
    %c0_9 = arith.constant 0 : index
    %c0_10 = arith.constant 0 : index
    %18 = vector.load %arg6[%c0_9, %c0_10] : memref<14x256xbf16, #tpu.memory_space<vmem>>, vector<4x256xbf16>
    tpu.vector_store %arg6[%c0_9, %c0_10], %17 {strides = array<i32>} : memref<14x256xbf16, #tpu.memory_space<vmem>>, vector<4x256xbf16>,
    %19 = arith.truncf %6 : vector<4x256xf32> to vector<4x256xbf16>
    %c4 = arith.constant 4 : index
    %c0_11 = arith.constant 0 : index
    %20 = vector.load %arg6[%c4, %c0_11] : memref<14x256xbf16, #tpu.memory_space<vmem>>, vector<4x256xbf16>
    tpu.vector_store %arg6[%c4, %c0_11], %19 {strides = array<i32>} : memref<14x256xbf16, #tpu.memory_space<vmem>>, vector<4x256xbf16>,
    %21 = arith.truncf %16 : vector<4x256xf32> to vector<4x256xbf16>
    %c8 = arith.constant 8 : index
    %c0_12 = arith.constant 0 : index
    %22 = vector.load %arg6[%c8, %c0_12] : memref<14x256xbf16, #tpu.memory_space<vmem>>, vector<4x256xbf16>
    tpu.vector_store %arg6[%c8, %c0_12], %21 {strides = array<i32>} : memref<14x256xbf16, #tpu.memory_space<vmem>>, vector<4x256xbf16>,
    %c0_13 = arith.constant 0 : index
    %c0_14 = arith.constant 0 : index
    %23 = vector.load %arg6[%c0_13, %c0_14] : memref<14x256xbf16, #tpu.memory_space<vmem>>, vector<14x256xbf16>
    %c0_15 = arith.constant 0 : index
    %c0_16 = arith.constant 0 : index
    %c0_17 = arith.constant 0 : index
    %c0_18 = arith.constant 0 : index
    %24 = vector.load %arg5[%c0_15, %c0_16, %c0_17, %c0_18] : memref<1x1x14x14xf32, #tpu.memory_space<vmem>>, vector<1x1x14x14xf32>
    %25 = vector.shape_cast %24 : vector<1x1x14x14xf32> to vector<14x14xf32>
    %cst_19 = arith.constant dense<0.000000e+00> : vector<14x14xf32>
    %26 = tpu.matmul %23, %23, %cst_19 {dimension_numbers = #tpu.dot_dimension_numbers<[1], [1], [0], [0], [0, 0, 1, 0], [], []>} : vector<14x256xbf16>, vector<14x256xbf16>, vector<14x14xf32> -> vector<14x14xf32>
    %27 = arith.addf %25, %26 : vector<14x14xf32>
    %c0_20 = arith.constant 0 : index
    %c0_21 = arith.constant 0 : index
    %c0_22 = arith.constant 0 : index
    %c0_23 = arith.constant 0 : index
    %28 = vector.load %arg5[%c0_20, %c0_21, %c0_22, %c0_23] : memref<1x1x14x14xf32, #tpu.memory_space<vmem>>, vector<1x1x14x14xf32>
    %29 = vector.shape_cast %28 : vector<1x1x14x14xf32> to vector<14x14xf32>
    %30 = vector.shape_cast %27 : vector<14x14xf32> to vector<1x1x14x14xf32>
    tpu.vector_store %arg5[%c0_20, %c0_21, %c0_22, %c0_23], %30 {strides = array<i32>} : memref<1x1x14x14xf32, #tpu.memory_space<vmem>>, vector<1x1x14x14xf32>,
    return
  }
  func.func @transform_0(%arg0: i32, %arg1: i32, %arg2: i32) -> (i32, i32, i32) {
    %c1_i32 = arith.constant 1 : i32
    %0 = arith.muli %arg0, %c1_i32 : i32
    %1 = arith.addi %0, %arg2 : i32
    %c0_i32 = arith.constant 0 : i32
    %c0_i32_0 = arith.constant 0 : i32
    return %arg1, %c0_i32, %1 : i32, i32, i32
  }
  func.func @transform_1(%arg0: i32, %arg1: i32, %arg2: i32) -> (i32, i32, i32) {
    %c1_i32 = arith.constant 1 : i32
    %0 = arith.muli %arg0, %c1_i32 : i32
    %1 = arith.addi %0, %arg2 : i32
    %c0_i32 = arith.constant 0 : i32
    %c0_i32_0 = arith.constant 0 : i32
    return %arg1, %c0_i32, %1 : i32, i32, i32
  }
  func.func @transform_2(%arg0: i32, %arg1: i32, %arg2: i32) -> (i32, i32, i32, i32) {
    %c0_i32 = arith.constant 0 : i32
    %c0_i32_0 = arith.constant 0 : i32
    %c0_i32_1 = arith.constant 0 : i32
    return %arg0, %arg1, %c0_i32, %c0_i32_0 : i32, i32, i32, i32
  }
}

</mosaic_0001>

<llo_original>
// kernel: tpu_custom_call.1
$region0: #{tpu_custom_call.1}
  #allocation0 [shape = 'u32[]', space=smem, size = 0x4, offset = 0x4, fixed_abs, tag = 'smem constant byte address 0x4 - core index']
  #allocation1 [shape = 'u32[144,128]{1,0:T(1,128)}', space=vmem, size = 0x12000, scoped, tag = 'internal scratch']
  #allocation2 [shape = 'bf16[14,256]{1,0:T(8,128)(2,1)}', space=vmem, size = 0x2000, scoped, tag = 'scratch operand']
  %s0 = inlined_call_operand.hbm [shape: f32[2,4,256], index: 0, kind: input, shape index: {}]
  %s1 = inlined_call_operand.hbm [shape: f32[2,4,256], index: 1, kind: input, shape index: {}]
  %s2 = inlined_call_operand.vmem [shape: f32[1,2,14,14], index: 2, kind: output, shape index: {}]
  %s3 = sld [smem:[#allocation0]]
  $region53: #{tpu_custom_call.1} parent=0
    _
  %s5 = ssub.s32 1, %s3
  %s6 = scalar_select 0, %s5, %s3
  $region1: #{tpu_custom_call.1} parent=0
    #allocation3 [shape = 'u8[8192]{0}', space=vmem, size = 0x2000, scoped, tag = 'input window, operand 0']
    #allocation4 [shape = 's32[2]{0}', space=sflag, size = 0x8, scoped, tag = 'scoped memory for tpu_custom_call.1']
    #allocation5 [shape = 'u8[8192]{0}', space=vmem, size = 0x2000, scoped, tag = 'input window, operand 1']
    #allocation6 [shape = 's32[2]{0}', space=sflag, size = 0x8, scoped, tag = 'scoped memory for tpu_custom_call.1']
    %7 = vsyncpa [#allocation4], 0
    %s8 = scalar_lea.sflag [#allocation4], 1
    %9 = vsyncpa %s8, 0
    %10 = vsyncpa [#allocation6], 0
    %s11 = scalar_lea.sflag [#allocation6], 1
    %12 = vsyncpa %s11, 0
    loop: start=0, step=1, limit=4
    $region2: #{tpu_custom_call.1} parent=1 // loop_pre_header
      _
    $region3: #{tpu_custom_call.1} parent=1 // loop_header
      %s14 = sphi 0, %s18
      %p15 = scmp.ge.s32.totalorder %s14, 4
      %s21 = sphi 0, %s40
      %s22 = sphi 0, %s36
      %s23 = sphi 0, %s32
      %s24 = sphi 0, %s21
      %s25 = sphi 0, %s22
      %s26 = sphi 0, %s23
      %s27 = sphi 0, %s24
      %s28 = sphi 0, %s25
      %s29 = sphi 0, %s26
      %s47 = sphi 0, %s49
      %s50 = sphi 0, %s47
      %s51 = sphi 0, %s50
      %s67 = sphi 0, %s51
      %s77 = sphi 0, %s79
      %s80 = sphi 0, %s77
      %s81 = sphi 0, %s80
      %s97 = sphi 0, %s81
      %s105 = sphi 0, %s107
      %s108 = sphi 0, %s105
      %s109 = sphi 0, %s108
      %s125 = sphi 0, %s109
    $region4: #{tpu_custom_call.1} parent=1 // loop_header_branch
      %17 = sbr.rel (%p15) target = $region8
    $region5: #{tpu_custom_call.1} parent=1 // loop_body
      %s19 = ssub.s32 %s14, 1
      %s20 = ssub.s32 %s14, 2
      %s30 = sadd.s32 1, %s23
      %p31 = scmp.ge.s32.totalorder %s30, 1
      %s32 = scalar_select %p31, 0, %s30
      %s33 = sadd.s32 1, %s22
      %s34 = scalar_select %p31, %s33, %s22
      %p35 = scmp.ge.s32.totalorder %s34, 2
      %s36 = scalar_select %p35, 0, %s34
      %s37 = sadd.s32 1, %s21
      %s38 = scalar_select %p35, %s37, %s21
      %p39 = scmp.ge.s32.totalorder %s38, 1
      %s40 = scalar_select %p39, 0, %s38
      %s41 = sadd.s32 %s21, %s23
      %s42 = sadd.s32 %s40, %s32
      %s43 = ssub.s32 %s22, %s36
      %s44 = ssub.s32 %s41, %s42
      %s45 = sor.u32 %s43, %s44
      %p46 = scmp.eq.s32.totalorder %s45, 0
      %s48 = sadd.s32 %s47, 1
      %s49 = scalar_select %p46, %s47, %s48
      %p52 = pneg %p46
      %p53 = scmp.eq.s32.totalorder %s14, 1
      %p54 = por %p52, %p53
      %p55 = scmp.ne.s32.totalorder %s47, %s50
      %p56 = scmp.eq.s32.totalorder %s14, 0
      %p57 = por %p55, %p56
      %p58 = scmp.ne.s32.totalorder %s47, %s50
      %p59 = scmp.eq.s32.totalorder %s19, 1
      %p60 = por %p58, %p59
      %p61 = scmp.ne.s32.totalorder %s50, %s51
      %p62 = scmp.eq.s32.totalorder %s19, 0
      %p63 = por %p61, %p62
      %p64 = scmp.ne.s32.totalorder %s50, %s51
      %p65 = scmp.eq.s32.totalorder %s20, 1
      %p66 = por %p64, %p65
      %p68 = scmp.ne.s32.totalorder %s51, %s67
      %p69 = scmp.eq.s32.totalorder %s20, 0
      %p70 = por %p68, %p69
      %s71 = sadd.s32 %s21, %s23
      %s72 = sadd.s32 %s40, %s32
      %s73 = ssub.s32 %s22, %s36
      %s74 = ssub.s32 %s71, %s72
      %s75 = sor.u32 %s73, %s74
      %p76 = scmp.eq.s32.totalorder %s75, 0
      %s78 = sadd.s32 %s77, 1
      %s79 = scalar_select %p76, %s77, %s78
      %p82 = pneg %p76
      %p83 = scmp.eq.s32.totalorder %s14, 1
      %p84 = por %p82, %p83
      %p85 = scmp.ne.s32.totalorder %s77, %s80
      %p86 = scmp.eq.s32.totalorder %s14, 0
      %p87 = por %p85, %p86
      %p88 = scmp.ne.s32.totalorder %s77, %s80
      %p89 = scmp.eq.s32.totalorder %s19, 1
      %p90 = por %p88, %p89
      %p91 = scmp.ne.s32.totalorder %s80, %s81
      %p92 = scmp.eq.s32.totalorder %s19, 0
      %p93 = por %p91, %p92
      %p94 = scmp.ne.s32.totalorder %s80, %s81
      %p95 = scmp.eq.s32.totalorder %s20, 1
      %p96 = por %p94, %p95
      %p98 = scmp.ne.s32.totalorder %s81, %s97
      %p99 = scmp.eq.s32.totalorder %s20, 0
      %p100 = por %p98, %p99
      %s101 = ssub.s32 %s21, %s40
      %s102 = ssub.s32 %s22, %s36
      %s103 = sor.u32 %s101, %s102
      %p104 = scmp.eq.s32.totalorder %s103, 0
      %s106 = sadd.s32 %s105, 1
      %s107 = scalar_select %p104, %s105, %s106
      %p110 = pneg %p104
      %p111 = scmp.eq.s32.totalorder %s14, 1
      %p112 = por %p110, %p111
      %p113 = scmp.ne.s32.totalorder %s105, %s108
      %p114 = scmp.eq.s32.totalorder %s14, 0
      %p115 = por %p113, %p114
      %p116 = scmp.ne.s32.totalorder %s105, %s108
      %p117 = scmp.eq.s32.totalorder %s19, 1
      %p118 = por %p116, %p117
      %p119 = scmp.ne.s32.totalorder %s108, %s109
      %p120 = scmp.eq.s32.totalorder %s19, 0
      %p121 = por %p119, %p120
      %p122 = scmp.ne.s32.totalorder %s108, %s109
      %p123 = scmp.eq.s32.totalorder %s20, 1
      %p124 = por %p122, %p123
      %p126 = scmp.ne.s32.totalorder %s109, %s125
      %p127 = scmp.eq.s32.totalorder %s20, 0
      %p128 = por %p126, %p127
      %p129 = scmp.le.s32.totalorder 1, %s14
      %p130 = scmp.lt.s32.totalorder %s14, 3
      %p131 = pnand %p129, %p130
      %p132 = pneg %p131
      // Predicated region
      $region9: #{tpu_custom_call.1} parent=5 // pred_check
        _
      $region10: #{tpu_custom_call.1} parent=5 // pred_check_branch
        %134 = sbr.rel (%p131) target = $region12
      $region11: #{tpu_custom_call.1} parent=5 // pred_region
        %s135 = ssub.s32 %s14, 1
      $region12: #{tpu_custom_call.1} parent=5 // pred_fallthru
        _
      %p136 = scmp.lt.s32.totalorder %s14, 2
      // Predicated region
      $region13: #{tpu_custom_call.1} parent=5 // pred_check
        %p137 = pneg %p136
      $region14: #{tpu_custom_call.1} parent=5 // pred_check_branch
        %139 = sbr.rel (%p137) target = $region16
      $region15: #{tpu_custom_call.1} parent=5 // pred_region
        // Predicated region
        $region17: #{tpu_custom_call.1} parent=15 // pred_check
          %p140 = pneg %p57
        $region18: #{tpu_custom_call.1} parent=15 // pred_check_branch
          %142 = sbr.rel (%p140) target = $region20
        $region19: #{tpu_custom_call.1} parent=15 // pred_region
          %s143 = sand.u32 %s47, 1
          %s144 = scalar_lea.sflag [#allocation4], %s143
          %s145 = sand.u32 %s47, 1
          %s146 = smul.addr %s145, 8
          %s147 = scalar_lea.vmem [#allocation3], %s146
          %s148 = sadd.s32 %s21, %s23
          %s149 = smul.u32 2, %s148
          %s151 = ssub.s32 128, 128
          %152 = vsyncadd %s144, %s151
          %s153 = smul.addr %s22, 2
          %s154 = sadd.s32 %s149, %s153
          %s155 = smul.addr %s154, 64
          %s156 = scalar_lea.hbm %s0, %s155
          %s158 = sshll.u32 %s147, 4
          %s159 = int_to_ptr.vmem [resolvable:$true] %s158
          %161 = dma.hbm_to_vmem [thread:$0]  %s156, 128, %s159, %s144
        $region20: #{tpu_custom_call.1} parent=15 // pred_fallthru
          _
        // Predicated region
        $region21: #{tpu_custom_call.1} parent=15 // pred_check
          %p162 = pneg %p87
        $region22: #{tpu_custom_call.1} parent=15 // pred_check_branch
          %164 = sbr.rel (%p162) target = $region24
        $region23: #{tpu_custom_call.1} parent=15 // pred_region
          %s165 = sand.u32 %s77, 1
          %s166 = scalar_lea.sflag [#allocation6], %s165
          %s167 = sand.u32 %s77, 1
          %s168 = smul.addr %s167, 8
          %s169 = scalar_lea.vmem [#allocation5], %s168
          %s170 = sadd.s32 %s21, %s23
          %s171 = smul.u32 2, %s170
          %s173 = ssub.s32 128, 128
          %174 = vsyncadd %s166, %s173
          %s175 = smul.addr %s22, 2
          %s176 = sadd.s32 %s171, %s175
          %s177 = smul.addr %s176, 64
          %s178 = scalar_lea.hbm %s1, %s177
          %s180 = sshll.u32 %s169, 4
          %s181 = int_to_ptr.vmem [resolvable:$true] %s180
          %183 = dma.hbm_to_vmem [thread:$0]  %s178, 128, %s181, %s166
        $region24: #{tpu_custom_call.1} parent=15 // pred_fallthru
          _
      $region16: #{tpu_custom_call.1} parent=5 // pred_fallthru
        _
      %p184 = scmp.le.s32.totalorder 1, %s14
      %p185 = scmp.lt.s32.totalorder %s14, 3
      %p186 = pnand %p184, %p185
      %p187 = pneg %p186
      // Predicated region
      $region25: #{tpu_custom_call.1} parent=5 // pred_check
        _
      $region26: #{tpu_custom_call.1} parent=5 // pred_check_branch
        %189 = sbr.rel (%p186) target = $region28
      $region27: #{tpu_custom_call.1} parent=5 // pred_region
        %s190 = ssub.s32 %s14, 1
        %s191 = sand.u32 %s50, 1
        %s192 = scalar_lea.sflag [#allocation4], %s191
        %s193 = sand.u32 %s50, 1
        %s194 = smul.addr %s193, 8
        %s195 = scalar_lea.vmem [#allocation3], %s194
        // Predicated region
        $region29: #{tpu_custom_call.1} parent=27 // pred_check
          %p196 = pneg %p63
        $region30: #{tpu_custom_call.1} parent=27 // pred_check_branch
          %198 = sbr.rel (%p196) target = $region32
        $region31: #{tpu_custom_call.1} parent=27 // pred_region
          %199 = dma.done %s192, 128
        $region32: #{tpu_custom_call.1} parent=27 // pred_fallthru
          _
        %s200 = sand.u32 %s80, 1
        %s201 = scalar_lea.sflag [#allocation6], %s200
        %s202 = sand.u32 %s80, 1
        %s203 = smul.addr %s202, 8
        %s204 = scalar_lea.vmem [#allocation5], %s203
        // Predicated region
        $region33: #{tpu_custom_call.1} parent=27 // pred_check
          %p205 = pneg %p93
        $region34: #{tpu_custom_call.1} parent=27 // pred_check_branch
          %207 = sbr.rel (%p205) target = $region36
        $region35: #{tpu_custom_call.1} parent=27 // pred_region
          %208 = dma.done %s201, 128
        $region36: #{tpu_custom_call.1} parent=27 // pred_fallthru
          _
        %s209 = sand.u32 %s50, 1
        %s210 = scalar_lea.sflag [#allocation4], %s209
        %s211 = sand.u32 %s50, 1
        %s212 = smul.addr %s211, 8
        %s213 = scalar_lea.vmem [#allocation3], %s212
        %p214 = pneg %p63
        %p215 = pneg %p60
        %s216 = sand.u32 %s80, 1
        %s217 = scalar_lea.sflag [#allocation6], %s216
        %s218 = sand.u32 %s80, 1
        %s219 = smul.addr %s218, 8
        %s220 = scalar_lea.vmem [#allocation5], %s219
        %p221 = pneg %p93
        %p222 = pneg %p90
        %p223 = pneg %p121
        %p224 = pneg %p118
        %p225 = scmp.lt.s32.totalorder %s24, 0
        %s226 = scalar_select %p225, %s24, 0
        %p227 = scmp.lt.s32.totalorder %s25, 1
        %s228 = scalar_select %p227, %s25, 1
        %s229 = smul.addr %s228, 2
        %s230 = smul.addr %s226, 4
        %s231 = sadd.s32 %s229, %s230
        %s232 = smul.addr %s231, 8
        %s233 = scalar_lea.vmem %s2, %s232
        %s234 = sadd.s32 %s24, %s26
        %s235 = smul.u32 2, %s234
        %s236 = sadd.s32 %s24, %s26
        %s237 = smul.u32 2, %s236
        %p238 = scmp.lt.s32.totalorder %s24, 0
        %s239 = scalar_select %p238, %s24, 0
        %p240 = scmp.lt.s32.totalorder %s25, 1
        %s241 = scalar_select %p240, %s25, 1
        %s242 = smul.addr %s241, 2
        %s243 = smul.addr %s239, 4
        %s244 = sadd.s32 %s242, %s243
        %s245 = smul.addr %s244, 8
        %s246 = scalar_lea.vmem %s2, %s245
        %p249 = scmp.eq.s32.totalorder %s26, 0
        // Predicated region
        $region37: #{tpu_custom_call.1} parent=27 // pred_check
          %p250 = pneg %p249
        $region38: #{tpu_custom_call.1} parent=27 // pred_check_branch
          %252 = sbr.rel (%p250) target = $region40
        $region39: #{tpu_custom_call.1} parent=27 // pred_region
          %vm253 = vcmask 113664
          %254 = vst.msk [vmem:[%s246] sm:$0xff] %vm253, 0.0
          %vm255 = vcmask 111616
          %256 = vst.msk [vmem:[%s246 + $0x8] sm:$0x3f] %vm255, 0.0
          %257 = vst [vmem:[#allocation2 + $0x8] sm:$0x44] 1065369472
        $region40: #{tpu_custom_call.1} parent=27 // pred_fallthru
          _
        %v258 = vld [vmem:[%s195] sm:$0xff]
        %v259 = vld [vmem:[%s204] sm:$0xff]
        %vm260 = vcmp.gt.f32.partialorder %v258, 0.5
        %v261 = vsub.f32 1.0, %v259
        %v262 = vsel %vm260, %v259, %v261
        %v263 = vmax.f32 %v262, 1e-07
        %v264 = vlog2.pop %v263
        %v265 = vmul.f32 %v264, 0.6931472
        %v266 = vsub.f32 0.0, %v265
        %v268 = vcombine.high %v258, %v258
        %v270 = vpack.c.bf16 %v258, %v258
        %v271 = vpack.c.bf16 %v268, %v268
        %v274 = vunpack.c.l.b16 %v270
        %v275 = vunpack.c.l.b16 %v271
        %v276 = vpack.c.b16 %v275, %v274
        %278 = vst [vmem:[#allocation2] sm:$0x33] %v276
        %v280 = vcombine.high %v259, %v259
        %v282 = vpack.c.bf16 %v259, %v259
        %v283 = vpack.c.bf16 %v280, %v280
        %v286 = vunpack.c.l.b16 %v282
        %v287 = vunpack.c.l.b16 %v283
        %v288 = vpack.c.b16 %v287, %v286
        %v289 = vrot.slane %v288, 6
        %291 = vst [vmem:[#allocation2] sm:$0xcc] %v289
        %v293 = vcombine.high %v266, %v266
        %v295 = vpack.c.bf16 %v266, %v266
        %v296 = vpack.c.bf16 %v293, %v293
        %v299 = vunpack.c.l.b16 %v295
        %v300 = vunpack.c.l.b16 %v296
        %v301 = vpack.c.b16 %v300, %v299
        %303 = vst [vmem:[#allocation2 + $0x8] sm:$0x33] %v301
        %v304 = vld [vmem:[#allocation2] sm:$0xff]
        %v305 = vld [vmem:[#allocation2 + $0x8] sm:$0x77]
        %v306 = vld [vmem:[%s246] sm:$0xff]
        %v307 = vld [vmem:[%s246 + $0x8] sm:$0x3f]
        %v310 = vunpack.c.l.b16 %v304
        %v311 = vunpack.c.h.b16 %v304
        %v312 = vunpack.c.l.b16 %v305
        %v313 = vunpack.c.h.b16 %v305
        %v314 = vpack.c.b16 %v312, %v310
        %v315 = vpack.c.b16 %v313, %v311
        %318 = vmatprep.subr.bf16.mxu0 %v315
        %319 = vmatpush1.bf16.xpose.msra.mxu0 %v314
        %320 = vmatprep.subr.bf16.mxu0 0
        %321 = vmatpush1.bf16.xpose.msra.mxu0 0
        %322 = vmatprep.subr.bf16.mxu0 0
        %323 = vmatpush1.bf16.xpose.msra.mxu0 0
        %324 = vmatprep.subr.bf16.mxu0 0
        %325 = vmatpush1.bf16.xpose.msra.mxu0 0
        %326 = vmatprep.subr.bf16.mxu0 0
        %327 = vmatpush1.bf16.xpose.msra.mxu0 0
        %328 = vmatprep.subr.bf16.mxu0 0
        %329 = vmatpush1.bf16.xpose.msra.mxu0 0
        %330 = vmatprep.subr.bf16.mxu0 0
        %331 = vmatpush1.bf16.xpose.msra.mxu0 0
        %332 = vmatprep.subr.bf16.mxu0 0
        %333 = vmatpush1.bf16.xpose.msra.mxu0 0
        %334 = vmatprep.subr.bf16.mxu0 0
        %335 = vmatpush1.bf16.xpose.msra.mxu0 0
        %336 = vmatprep.subr.bf16.mxu0 0
        %337 = vmatpush1.bf16.xpose.msra.mxu0 0
        %338 = vmatprep.subr.bf16.mxu0 0
        %339 = vmatpush1.bf16.xpose.msra.mxu0 0
        %340 = vmatprep.subr.bf16.mxu0 0
        %341 = vmatpush1.bf16.xpose.msra.mxu0 0
        %342 = vmatprep.subr.bf16.mxu0 0
        %343 = vmatpush1.bf16.xpose.msra.mxu0 0
        %344 = vmatprep.subr.bf16.mxu0 0
        %345 = vmatpush1.bf16.xpose.msra.mxu0 0
        %346 = vmatprep.subr.bf16.mxu0 0
        %347 = vmatpush1.bf16.xpose.msra.mxu0 0
        %348 = vmatprep.subr.bf16.mxu0 0
        %349 = vmatpush1.bf16.xpose.msra.mxu0 0
        %350 = vmatprep.mubr.bf16.mxu0 %v315
        %351 = vmatmul.mubr.bf16.gmra.mrb[0].mxu0 %v314
        %v352 = vpop.f32.mrb[0].mxu0
        %v353 = vadd.f32 0.0, %v352
        %v354 = vpop.f32.mrb[0].mxu0
        %v355 = vpop.f32.mrb[0].mxu0
        %v356 = vadd.f32 0.0, %v355
        %v357 = vpop.f32.mrb[0].mxu0
        %358 = vdwg.mxu0
        %v359 = vadd.f32 %v306, %v353
        %v360 = vadd.f32 %v307, %v356
        %vm361 = vcmask 113664
        %362 = vst.msk [vmem:[%s246] sm:$0xff] %vm361, %v359
        %vm363 = vcmask 111616
        %364 = vst.msk [vmem:[%s246 + $0x8] sm:$0x3f] %vm363, %v360
        %p365 = scmp.lt.s32.totalorder %s24, 0
        %s366 = scalar_select %p365, %s24, 0
        %p367 = scmp.lt.s32.totalorder %s25, 1
        %s368 = scalar_select %p367, %s25, 1
        %s369 = smul.addr %s368, 2
        %s370 = smul.addr %s366, 4
        %s371 = sadd.s32 %s369, %s370
        %s372 = smul.addr %s371, 8
        %s373 = scalar_lea.vmem %s2, %s372
        // Predicated region
        $region41: #{tpu_custom_call.1} parent=27 // pred_check
          %p374 = pneg %p118
        $region42: #{tpu_custom_call.1} parent=27 // pred_check_branch
          %376 = sbr.rel (%p374) target = $region44
        $region43: #{tpu_custom_call.1} parent=27 // pred_region
          _
        $region44: #{tpu_custom_call.1} parent=27 // pred_fallthru
          _
      $region28: #{tpu_custom_call.1} parent=5 // pred_fallthru
        _
      %p377 = scmp.le.s32.totalorder 2, %s14
      // Predicated region
      $region45: #{tpu_custom_call.1} parent=5 // pred_check
        %p378 = pneg %p377
      $region46: #{tpu_custom_call.1} parent=5 // pred_check_branch
        %380 = sbr.rel (%p378) target = $region48
      $region47: #{tpu_custom_call.1} parent=5 // pred_region
        %s381 = ssub.s32 %s14, 2
        // Predicated region
        $region49: #{tpu_custom_call.1} parent=47 // pred_check
          %p382 = pneg %p124
        $region50: #{tpu_custom_call.1} parent=47 // pred_check_branch
          %384 = sbr.rel (%p382) target = $region52
        $region51: #{tpu_custom_call.1} parent=47 // pred_region
          %p385 = scmp.lt.s32.totalorder %s27, 0
          %s386 = scalar_select %p385, %s27, 0
          %p387 = scmp.lt.s32.totalorder %s28, 1
          %s388 = scalar_select %p387, %s28, 1
          %s389 = smul.addr %s388, 2
          %s390 = smul.addr %s386, 4
          %s391 = sadd.s32 %s389, %s390
          %s392 = smul.addr %s391, 8
          %s393 = scalar_lea.vmem %s2, %s392
        $region52: #{tpu_custom_call.1} parent=47 // pred_fallthru
          _
      $region48: #{tpu_custom_call.1} parent=5 // pred_fallthru
        _
    $region6: #{tpu_custom_call.1} parent=1 // loop_footer
      %s18 = sadd.s32 1, %s14
    $region7: #{tpu_custom_call.1} parent=1 // loop_footer_branch
      %13 = sbr.rel target = $region3
    $region8: #{tpu_custom_call.1} parent=1 // loop_exit
      _
    %394 = vsyncpa [#allocation4], 1
    %s395 = scalar_lea.sflag [#allocation4], 1
    %396 = vsyncpa %s395, 1
    %397 = vsyncpa [#allocation6], 1
    %s398 = scalar_lea.sflag [#allocation6], 1
    %399 = vsyncpa %s398, 1

</llo_original>
